<compile_context>
chip_gen: v7x
topology: tpu7x:2x2x1
jax: 0.10.0
libtpu: 0.0.40
codegen_flags: <defaults>
</compile_context>

<pallas_src>
import functools

import jax
import jax.numpy as jnp
from jax.experimental import pallas as pl
from jax.experimental.pallas import tpu as pltpu

LANE = 128   # output columns padded to a multiple of this (small-batch path)
SUB = 8      # sublane alignment for row tiles


def _round_up(x, m):
    return ((x + m - 1) // m) * m


def _translation_kernel_dense(x_ref, wfc_ref, bfc_ref, wtr_ref, btr_ref, o_ref):
    """make_dense=True: fc (1x1x1 conv) + LeakyReLU(0.2) + translation conv
    + tanh * 0.51, fused on one (tm, Cin) row tile."""
    x = x_ref[...].astype(jnp.float32)
    h = jnp.dot(x, wfc_ref[...], preferred_element_type=jnp.float32) + bfc_ref[...]
    h = jnp.where(h >= 0, h, 0.2 * h)          # LeakyReLU(negative_slope=0.2)
    t = jnp.dot(h, wtr_ref[...], preferred_element_type=jnp.float32) + btr_ref[...]
    o_ref[...] = (jnp.tanh(t) * 0.51).astype(o_ref.dtype)


def _translation_kernel(x_ref, wtr_ref, btr_ref, o_ref):
    """make_dense=False: translation conv + tanh * 0.51."""
    x = x_ref[...].astype(jnp.float32)
    t = jnp.dot(x, wtr_ref[...], preferred_element_type=jnp.float32) + btr_ref[...]
    o_ref[...] = (jnp.tanh(t) * 0.51).astype(o_ref.dtype)


def prepare_params(raw_params, make_dense=False):
    """One-time (init / param-load time) preparation so the jitted forward
    launches no per-call pad / update-slice ops:
      * 'w_tr'   : (Cin, Cout)   unpadded weights   (large-batch path)
      * 'b_tr'   : (1, Cout)     unpadded bias row
      * 'w_tr_p' : (Cin, cout_p) lane-padded weights (small-batch path)
      * 'b_tr_p' : (1, cout_p)   lane-padded bias row (padding columns are 0)
      * 'w_fc'/'b_fc' (dense only): (Cin, Cin) / (1, Cin)
    """
    w_tr = jnp.asarray(raw_params["w_tr"], jnp.float32)
    b_tr = jnp.asarray(raw_params["b_tr"], jnp.float32)
    cin, cout = w_tr.shape
    cout_p = _round_up(cout, LANE)
    prepped = {
        "w_tr": w_tr,
        "b_tr": b_tr.reshape(1, cout),
        "w_tr_p": jnp.zeros((cin, cout_p), jnp.float32).at[:, :cout].set(w_tr),
        "b_tr_p": jnp.zeros((1, cout_p), jnp.float32).at[0, :cout].set(b_tr),
    }
    if make_dense:
        prepped["w_fc"] = jnp.asarray(raw_params["w_fc"], jnp.float32)
        prepped["b_fc"] = jnp.asarray(raw_params["b_fc"], jnp.float32).reshape(1, cin)
    return jax.tree_util.tree_map(jax.block_until_ready, prepped)


@functools.partial(jax.jit, static_argnames=("make_dense", "tile_rows"))
def translation_forward(X, params, *, make_dense=False, tile_rows=1024):
    """X: (B, C, D, H, W) float32, NCDHW like the PyTorch module.
    params: output of prepare_params().
    Returns: (B, Cout) == tanh(conv(...))[:, :, 0, 0, 0] * 0.51
    """
    B, Cin, D, H, W = X.shape
    Cout = params["b_tr"].shape[1]
    cout_p = params["b_tr_p"].shape[1]

    if B == 0:
        return jnp.zeros((0, Cout), X.dtype)

    # Only compute the voxel that survives the final slice (exact for 1x1x1
    # convs + pointwise nonlinearities).
    x0 = X[:, :, 0, 0, 0]                       # (B, Cin)

    # --- Row tiling -----------------------------------------------------------
    rows_aligned = _round_up(B, SUB)
    tm_cap = _round_up(tile_rows, SUB)
    # Once there is enough work, force >= 2 grid steps so the "parallel" row
    # axis shards across v7x's two TensorCores (no-op cost on v5e/v6e grids
    # this large; tiny batches stay single-step to keep dispatch minimal).
    if rows_aligned >= 256:
        tm_cap = min(tm_cap, _round_up(pl.cdiv(rows_aligned, 2), SUB))
    tm = min(tm_cap, rows_aligned)

    if tm >= rows_aligned:
        # Single tile: block == full (unpadded) array -> no row padding needed.
        n_rows = B
        tm = B
        x_p = x0
    else:
        n_rows = _round_up(rows_aligned, tm)
        x_p = jnp.pad(x0, ((0, n_rows - B), (0, 0))) if n_rows != B else x0

    # --- Output lane padding, gated on batch size -----------------------------
    # Small batch: pad Cout -> 128 for unmasked full-lane stores (extra bytes
    # negligible).  Large batch: the padded write would dominate HBM traffic
    # (and tanh/EUP work), so store the true Cout columns instead.
    lane_pad = n_rows <= 1024
    if lane_pad:
        w_tr, b_tr, c_store = params["w_tr_p"], params["b_tr_p"], cout_p
    else:
        w_tr, b_tr, c_store = params["w_tr"], params["b_tr"], Cout

    grid = (pl.cdiv(n_rows, tm),)
    x_spec = pl.BlockSpec((tm, Cin), lambda i: (i, 0))
    o_spec = pl.BlockSpec((tm, c_store), lambda i: (i, 0))
    # Invariant weights/biases: whole-array resident in VMEM, no per-step
    # pipelining / double-buffering.
    resident = pl.BlockSpec(memory_space=pltpu.MemorySpace.VMEM)

    if make_dense:
        kernel = _translation_kernel_dense
        operands = (x_p, params["w_fc"], params["b_fc"], w_tr, b_tr)
        in_specs = [x_spec, resident, resident, resident, resident]
    else:
        kernel = _translation_kernel
        operands = (x_p, w_tr, b_tr)
        in_specs = [x_spec, resident, resident]

    out_p = pl.pallas_call(
        kernel,
        out_shape=jax.ShapeDtypeStruct((n_rows, c_store), X.dtype),
        grid=grid,
        in_specs=in_specs,
        out_specs=o_spec,
        compiler_params=pltpu.CompilerParams(
            dimension_semantics=("parallel",),
            # Let XLA fuse the x0 slice / row pad into operand 0.
            allow_input_fusion=[True] + [False] * (len(operands) - 1),
        ),
    )(*operands)

    # Drop row padding and lane padding (no-ops when nothing was padded).
    return out_p[:B, :Cout]


def init_params(key, input_channels, n_primitives, make_dense):
    """Deterministic synthetic parameters (Conv3d 1x1x1 == dense over channels).
    Weights stored as (Cin, Cout), i.e. PyTorch's (Cout, Cin, 1, 1, 1) transposed."""
    cout = n_primitives * 3
    k1, k2, k3, k4 = jax.random.split(key, 4)
    params = {
        "w_tr": (jax.random.normal(k1, (input_channels, cout), jnp.float32)
                 * (1.0 / jnp.sqrt(input_channels))),
        "b_tr": jax.random.normal(k2, (cout,), jnp.float32) * 0.1,
    }
    if make_dense:
        params["w_fc"] = (jax.random.normal(k3, (input_channels, input_channels),
                                            jnp.float32)
                          * (1.0 / jnp.sqrt(input_channels)))
        params["b_fc"] = jax.random.normal(k4, (input_channels,), jnp.float32) * 0.1
    return params


def _reference(X, params, make_dense):
    """Pure-JAX reference of the PyTorch forward (full-volume 1x1x1 convs,
    then the [:, :, 0, 0, 0] slice, exactly like the module)."""
    x = jnp.transpose(X, (0, 2, 3, 4, 1))  # (B, D, H, W, C)
    if make_dense:
        h = jnp.einsum("bdhwc,ce->bdhwe", x, params["w_fc"]) + params["b_fc"]
        x = jnp.where(h >= 0, h, 0.2 * h)
    t = jnp.einsum("bdhwc,ce->bdhwe", x, params["w_tr"]) + params["b_tr"]
    t = jnp.tanh(t) * 0.51
    return t[:, 0, 0, 0, :]  # (B, Cout) == translations[:, :, 0, 0, 0]


if __name__ == "__main__":
    key = jax.random.PRNGKey(0)
    kx, kp1, kp2, kx2 = jax.random.split(key, 4)

    # Small shapes consistent with the module: B=2, C=32, spatial 4^3,
    # n_primitives=8 -> output (2, 24).
    B, Cin, D, H, W = 2, 32, 4, 4, 4
    n_primitives = 8
    X = jax.random.normal(kx, (B, Cin, D, H, W), jnp.float32)

    # make_dense = True path
    raw_d = init_params(kp1, Cin, n_primitives, make_dense=True)
    params_d = prepare_params(raw_d, make_dense=True)
    out_d = jax.block_until_ready(
        translation_forward(X, params_d, make_dense=True))
    ref_d = _reference(X, raw_d, make_dense=True)
    assert out_d.shape == (B, n_primitives * 3), out_d.shape
    assert jnp.allclose(out_d, ref_d, atol=1e-5, rtol=1e-5), "dense path mismatch"

    # make_dense = False path
    raw_s = init_params(kp2, Cin, n_primitives, make_dense=False)
    params_s = prepare_params(raw_s, make_dense=False)
    out_s = jax.block_until_ready(
        translation_forward(X, params_s, make_dense=False))
    ref_s = _reference(X, raw_s, make_dense=False)
    assert out_s.shape == (B, n_primitives * 3), out_s.shape
    assert jnp.allclose(out_s, ref_s, atol=1e-5, rtol=1e-5), "simple path mismatch"

    # Larger-batch sanity check: exercises the multi-step row grid (>= 2 tiles
    # for v7x's two TensorCores) and the unpadded-Cout output path.
    B2 = 1040
    X2 = jax.random.normal(kx2, (B2, Cin, 1, 1, 1), jnp.float32)
    out_l = jax.block_until_ready(
        translation_forward(X2, params_s, make_dense=False))
    ref_l = _reference(X2, raw_s, make_dense=False)
    assert out_l.shape == (B2, n_primitives * 3), out_l.shape
    assert jnp.allclose(out_l, ref_l, atol=1e-5, rtol=1e-5), "large-batch mismatch"

    print("KERNEL_OK")
</pallas_src>

<mosaic_0001>
module attributes {stable_mosaic.version = 11 : i64} {
  func.func @_translation_kernel_dense(%arg0: i32, %arg1: memref<2x32xf32, #tpu.memory_space<vmem>>, %arg2: memref<32x32xf32, #tpu.memory_space<vmem>>, %arg3: memref<1x32xf32, #tpu.memory_space<vmem>>, %arg4: memref<32x128xf32, #tpu.memory_space<vmem>>, %arg5: memref<1x128xf32, #tpu.memory_space<vmem>>, %arg6: memref<2x128xf32, #tpu.memory_space<vmem>>) attributes {dimension_semantics = [#tpu.dimension_semantics<parallel>], iteration_bounds = array<i64: 1>, scalar_prefetch = 0 : i64, scratch_operands = 0 : i64, tpu.core_type = #tpu.core_type<tc>, window_params = [{transform_indices = @transform_0, window_bounds = array<i64: 2, 32>}, {pipeline_mode = #tpu.pipeline_mode<synchronous>, transform_indices = @transform_1, window_bounds = array<i64: 32, 32>}, {pipeline_mode = #tpu.pipeline_mode<synchronous>, transform_indices = @transform_2, window_bounds = array<i64: 1, 32>}, {pipeline_mode = #tpu.pipeline_mode<synchronous>, transform_indices = @transform_3, window_bounds = array<i64: 32, 128>}, {pipeline_mode = #tpu.pipeline_mode<synchronous>, transform_indices = @transform_4, window_bounds = array<i64: 1, 128>}, {transform_indices = @transform_5, window_bounds = array<i64: 2, 128>}]} {
    %c0 = arith.constant 0 : index
    %c0_0 = arith.constant 0 : index
    %0 = vector.load %arg1[%c0, %c0_0] : memref<2x32xf32, #tpu.memory_space<vmem>>, vector<2x32xf32>
    %c0_1 = arith.constant 0 : index
    %c0_2 = arith.constant 0 : index
    %1 = vector.load %arg2[%c0_1, %c0_2] : memref<32x32xf32, #tpu.memory_space<vmem>>, vector<32x32xf32>
    %cst = arith.constant dense<0.000000e+00> : vector<2x32xf32>
    %2 = tpu.matmul %0, %1, %cst {dimension_numbers = #tpu.dot_dimension_numbers<[1], [0], [0], [1], [0, 0, 1, 1], [], []>} : vector<2x32xf32>, vector<32x32xf32>, vector<2x32xf32> -> vector<2x32xf32>
    %c0_3 = arith.constant 0 : index
    %c0_4 = arith.constant 0 : index
    %3 = vector.load %arg3[%c0_3, %c0_4] : memref<1x32xf32, #tpu.memory_space<vmem>>, vector<1x32xf32>
    %4 = vector.broadcast %3 : vector<1x32xf32> to vector<2x32xf32>
    %5 = arith.addf %2, %4 : vector<2x32xf32>
    %cst_5 = arith.constant 0.000000e+00 : f32
    %6 = vector.broadcast %cst_5 : f32 to vector<2x32xf32>
    %7 = arith.cmpf oge, %5, %6 : vector<2x32xf32>
    %cst_6 = arith.constant 2.000000e-01 : f32
    %8 = vector.broadcast %cst_6 : f32 to vector<2x32xf32>
    %9 = arith.mulf %8, %5 : vector<2x32xf32>
    %10 = arith.select %7, %5, %9 : vector<2x32xi1>, vector<2x32xf32>
    %c0_7 = arith.constant 0 : index
    %c0_8 = arith.constant 0 : index
    %11 = vector.load %arg4[%c0_7, %c0_8] : memref<32x128xf32, #tpu.memory_space<vmem>>, vector<32x128xf32>
    %cst_9 = arith.constant dense<0.000000e+00> : vector<2x128xf32>
    %12 = tpu.matmul %10, %11, %cst_9 {dimension_numbers = #tpu.dot_dimension_numbers<[1], [0], [0], [1], [0, 0, 1, 1], [], []>} : vector<2x32xf32>, vector<32x128xf32>, vector<2x128xf32> -> vector<2x128xf32>
    %c0_10 = arith.constant 0 : index
    %c0_11 = arith.constant 0 : index
    %13 = vector.load %arg5[%c0_10, %c0_11] : memref<1x128xf32, #tpu.memory_space<vmem>>, vector<1x128xf32>
    %14 = vector.broadcast %13 : vector<1x128xf32> to vector<2x128xf32>
    %15 = arith.addf %12, %14 : vector<2x128xf32>
    %16 = math.tanh %15 : vector<2x128xf32>
    %cst_12 = arith.constant 5.100000e-01 : f32
    %17 = vector.broadcast %cst_12 : f32 to vector<2x128xf32>
    %18 = arith.mulf %16, %17 : vector<2x128xf32>
    %c0_13 = arith.constant 0 : index
    %c0_14 = arith.constant 0 : index
    %19 = vector.load %arg6[%c0_13, %c0_14] : memref<2x128xf32, #tpu.memory_space<vmem>>, vector<2x128xf32>
    tpu.vector_store %arg6[%c0_13, %c0_14], %18 {strides = array<i32>} : memref<2x128xf32, #tpu.memory_space<vmem>>, vector<2x128xf32>,
    return
  }
  func.func @transform_0(%arg0: i32) -> (i32, i32) {
    %c0_i32 = arith.constant 0 : i32
    %c0_i32_0 = arith.constant 0 : i32
    return %arg0, %c0_i32 : i32, i32
  }
  func.func @transform_1(%arg0: i32) -> (i32, i32) {
    %c0_i32 = arith.constant 0 : i32
    %c0_i32_0 = arith.constant 0 : i32
    %c0_i32_1 = arith.constant 0 : i32
    return %c0_i32, %c0_i32_0 : i32, i32
  }
  func.func @transform_2(%arg0: i32) -> (i32, i32) {
    %c0_i32 = arith.constant 0 : i32
    %c0_i32_0 = arith.constant 0 : i32
    %c0_i32_1 = arith.constant 0 : i32
    return %c0_i32, %c0_i32_0 : i32, i32
  }
  func.func @transform_3(%arg0: i32) -> (i32, i32) {
    %c0_i32 = arith.constant 0 : i32
    %c0_i32_0 = arith.constant 0 : i32
    %c0_i32_1 = arith.constant 0 : i32
    return %c0_i32, %c0_i32_0 : i32, i32
  }
  func.func @transform_4(%arg0: i32) -> (i32, i32) {
    %c0_i32 = arith.constant 0 : i32
    %c0_i32_0 = arith.constant 0 : i32
    %c0_i32_1 = arith.constant 0 : i32
    return %c0_i32, %c0_i32_0 : i32, i32
  }
  func.func @transform_5(%arg0: i32) -> (i32, i32) {
    %c0_i32 = arith.constant 0 : i32
    %c0_i32_0 = arith.constant 0 : i32
    return %arg0, %c0_i32 : i32, i32
  }
}

</mosaic_0001>

<llo_original>
// kernel: translation_forward.1
$region0: #{translation_forward.1}
  #allocation0 [shape = 'u32[]', space=smem, size = 0x4, offset = 0x4, fixed_abs, tag = 'smem constant byte address 0x4 - core index']
  #allocation1 [shape = 'u32[144,128]{1,0:T(1,128)}', space=vmem, size = 0x12000, scoped, tag = 'internal scratch']
  %s0 = inlined_call_operand.vmem [shape: f32[2,32], index: 0, kind: input, shape index: {}]
  %s1 = inlined_call_operand.hbm [shape: f32[32,32], index: 1, kind: input, shape index: {}]
  %s2 = inlined_call_operand.vmem [shape: f32[1,32], index: 2, kind: input, shape index: {}]
  %s3 = inlined_call_operand.hbm [shape: f32[32,128], index: 3, kind: input, shape index: {}]
  %s4 = inlined_call_operand.vmem [shape: f32[1,128], index: 4, kind: input, shape index: {}]
  %s5 = inlined_call_operand.hbm [shape: f32[2,128], index: 5, kind: output, shape index: {}]
  %s6 = sld [smem:[#allocation0]]
  $region38: #{translation_forward.1} parent=0
    _
  %s8 = ssub.s32 1, %s6
  %s9 = scalar_select 0, %s8, %s6
  $region1: #{translation_forward.1} parent=0
    #allocation2 [shape = 'u8[16384]{0}', space=vmem, size = 0x4000, scoped, tag = 'input window, operand 1, single buffered']
    #allocation3 [shape = 's32[1]{0}', space=sflag, size = 0x4, scoped, tag = 'scoped memory for translation_forward.1']
    #allocation4 [shape = 's32[1]{0}', space=sflag, size = 0x4, scoped, tag = 'scoped memory for translation_forward.1']
    #allocation5 [shape = 'u8[16384]{0}', space=vmem, size = 0x4000, scoped, tag = 'input window, operand 3, single buffered']
    #allocation6 [shape = 's32[1]{0}', space=sflag, size = 0x4, scoped, tag = 'scoped memory for translation_forward.1']
    #allocation7 [shape = 'u8[1024]{0}', space=vmem, size = 0x400, scoped, tag = 'output window, operand 0, single buffered']
    %10 = vsyncpa [#allocation3], 0
    %11 = vsyncpa [#allocation6], 0
    %12 = vsyncpa [#allocation4], 0
    // Predicated region
    $region2: #{translation_forward.1} parent=1 // pred_check
      _
    $region3: #{translation_forward.1} parent=1 // pred_check_branch
      %14 = sbr.rel (0) target = $region5
    $region4: #{translation_forward.1} parent=1 // pred_region
      _
    $region5: #{translation_forward.1} parent=1 // pred_fallthru
      _
    // Predicated region
    $region6: #{translation_forward.1} parent=1 // pred_check
      _
    $region7: #{translation_forward.1} parent=1 // pred_check_branch
      %16 = sbr.rel (0) target = $region9
    $region8: #{translation_forward.1} parent=1 // pred_region
      %s18 = ssub.s32 512, 512
      %19 = vsyncadd [#allocation3], %s18
      %s20 = sshll.u32 [#allocation2], 4
      %s21 = int_to_ptr.vmem [resolvable:$true] %s20
      %26 = dma.hbm_to_vmem [thread:$0]  %s1, 512, %s21, [#allocation3], 128, 128, 8
    $region9: #{translation_forward.1} parent=1 // pred_fallthru
      _
    // Predicated region
    $region10: #{translation_forward.1} parent=1 // pred_check
      _
    $region11: #{translation_forward.1} parent=1 // pred_check_branch
      %28 = sbr.rel (0) target = $region13
    $region12: #{translation_forward.1} parent=1 // pred_region
      _
    $region13: #{translation_forward.1} parent=1 // pred_fallthru
      _
    // Predicated region
    $region14: #{translation_forward.1} parent=1 // pred_check
      _
    $region15: #{translation_forward.1} parent=1 // pred_check_branch
      %30 = sbr.rel (0) target = $region17
    $region16: #{translation_forward.1} parent=1 // pred_region
      %s32 = ssub.s32 512, 512
      %33 = vsyncadd [#allocation6], %s32
      %s34 = sshll.u32 [#allocation5], 4
      %s35 = int_to_ptr.vmem [resolvable:$true] %s34
      %40 = dma.hbm_to_vmem [thread:$0]  %s3, 512, %s35, [#allocation6], 128, 128, 8
    $region17: #{translation_forward.1} parent=1 // pred_fallthru
      _
    // Predicated region
    $region18: #{translation_forward.1} parent=1 // pred_check
      _
    $region19: #{translation_forward.1} parent=1 // pred_check_branch
      %42 = sbr.rel (0) target = $region21
    $region20: #{translation_forward.1} parent=1 // pred_region
      _
    $region21: #{translation_forward.1} parent=1 // pred_fallthru
      _
    // Predicated region
    $region22: #{translation_forward.1} parent=1 // pred_check
      _
    $region23: #{translation_forward.1} parent=1 // pred_check_branch
      %44 = sbr.rel (0) target = $region25
    $region24: #{translation_forward.1} parent=1 // pred_region
      %45 = dma.done [#allocation3], 512
    $region25: #{translation_forward.1} parent=1 // pred_fallthru
      _
    // Predicated region
    $region26: #{translation_forward.1} parent=1 // pred_check
      _
    $region27: #{translation_forward.1} parent=1 // pred_check_branch
      %47 = sbr.rel (0) target = $region29
    $region28: #{translation_forward.1} parent=1 // pred_region
      %48 = dma.done [#allocation6], 512
    $region29: #{translation_forward.1} parent=1 // pred_fallthru
      _
    %v49 = vld [vmem:[%s0] sm:$0x3]
    %v50 = vld [vmem:[#allocation2] sm:$0xff]
    %v51 = vld [vmem:[#allocation2 + $0x8] sm:$0xff]
    %v52 = vld [vmem:[#allocation2 + $0x10] sm:$0xff]
    %v53 = vld [vmem:[#allocation2 + $0x18] sm:$0xff]
    %v54 = vld [vmem:[%s2] sm:$0x1]
    %v56 = vlaneseq
    %v57 = vshrl.u32 %v56, 7
    %v58 = vsub.s32 0, %v57
    %v59 = vrot.slane %v54, %v58
    %vm61 = vcmask 261120
    %v63 = vsel %vm61, %v49, 0
    %65 = vmatprep.subr.mxu0 0.0
    %66 = vmatpush1.msra.mxu0 %v50
    %67 = vmatprep.subr.mxu0 0.0
    %68 = vmatpush1.msra.mxu0 %v51
    %69 = vmatprep.subr.mxu0 0.0
    %70 = vmatpush1.msra.mxu0 %v52
    %71 = vmatprep.subr.mxu0 0.0
    %72 = vmatpush1.msra.mxu0 %v53
    %73 = vmatprep.subr.mxu0 0.0
    %74 = vmatpush1.msra.mxu0 0.0
    %75 = vmatprep.subr.mxu0 0.0
    %76 = vmatpush1.msra.mxu0 0.0
    %77 = vmatprep.subr.mxu0 0.0
    %78 = vmatpush1.msra.mxu0 0.0
    %79 = vmatprep.subr.mxu0 0.0
    %80 = vmatpush1.msra.mxu0 0.0
    %81 = vmatprep.subr.mxu0 0.0
    %82 = vmatpush1.msra.mxu0 0.0
    %83 = vmatprep.subr.mxu0 0.0
    %84 = vmatpush1.msra.mxu0 0.0
    %85 = vmatprep.subr.mxu0 0.0
    %86 = vmatpush1.msra.mxu0 0.0
    %87 = vmatprep.subr.mxu0 0.0
    %88 = vmatpush1.msra.mxu0 0.0
    %89 = vmatprep.subr.mxu0 0.0
    %90 = vmatpush1.msra.mxu0 0.0
    %91 = vmatprep.subr.mxu0 0.0
    %92 = vmatpush1.msra.mxu0 0.0
    %93 = vmatprep.subr.mxu0 0.0
    %94 = vmatpush1.msra.mxu0 0.0
    %95 = vmatprep.subr.mxu0 0.0
    %96 = vmatpush1.msra.mxu0 0.0
    %97 = vmatprep.subr.mxu0 0.0
    %98 = vmatpush1.msra.mxu0 0.0
    %99 = vmatprep.subr.mxu0 0.0
    %100 = vmatpush1.msra.mxu0 0.0
    %101 = vmatprep.subr.mxu0 0.0
    %102 = vmatpush1.msra.mxu0 0.0
    %103 = vmatprep.subr.mxu0 0.0
    %104 = vmatpush1.msra.mxu0 0.0
    %105 = vmatprep.subr.mxu0 0.0
    %106 = vmatpush1.msra.mxu0 0.0
    %107 = vmatprep.subr.mxu0 0.0
    %108 = vmatpush1.msra.mxu0 0.0
    %109 = vmatprep.subr.mxu0 0.0
    %110 = vmatpush1.msra.mxu0 0.0
    %111 = vmatprep.subr.mxu0 0.0
    %112 = vmatpush1.msra.mxu0 0.0
    %113 = vmatprep.subr.mxu0 0.0
    %114 = vmatpush1.msra.mxu0 0.0
    %115 = vmatprep.subr.mxu0 0.0
    %116 = vmatpush1.msra.mxu0 0.0
    %117 = vmatprep.subr.mxu0 0.0
    %118 = vmatpush1.msra.mxu0 0.0
    %119 = vmatprep.subr.mxu0 0.0
    %120 = vmatpush1.msra.mxu0 0.0
    %121 = vmatprep.subr.mxu0 0.0
    %122 = vmatpush1.msra.mxu0 0.0
    %123 = vmatprep.subr.mxu0 0.0
    %124 = vmatpush1.msra.mxu0 0.0
    %125 = vmatprep.subr.mxu0 0.0
    %126 = vmatpush1.msra.mxu0 0.0
    %127 = vmatprep.subr.mxu0 0.0
    %128 = vmatpush1.msra.mxu0 0.0
    %129 = vmatprep.mubr.f32.mxu0 0.0
    %130 = vmatmul.mubr.f32.gmra.mrb[0].mxu0 %v63
    %v131 = vpop.f32.mrb[0].mxu0
    %v132 = vadd.f32 %v59, %v131
    %v133 = vpop.f32.mrb[0].mxu0
    %134 = vdwg.mxu0
    %vm135 = vcmp.ge.f32.partialorder %v132, 0.0
    %v136 = vmul.f32 %v132, 0.2
    %v137 = vsel %vm135, %v132, %v136
    %v138 = vld [vmem:[#allocation5] sm:$0xff]
    %v139 = vld [vmem:[#allocation5 + $0x8] sm:$0xff]
    %v140 = vld [vmem:[#allocation5 + $0x10] sm:$0xff]
    %v141 = vld [vmem:[#allocation5 + $0x18] sm:$0xff]
    %v142 = vld [vmem:[%s4] sm:$0x1]
    %v144 = vlaneseq
    %v145 = vshrl.u32 %v144, 7
    %v146 = vsub.s32 0, %v145
    %v147 = vrot.slane %v142, %v146
    %v150 = vsel %vm61, %v137, 0
    %152 = vmatprep.subr.mxu0 0.0
    %153 = vmatpush1.msra.mxu0 %v138
    %154 = vmatprep.subr.mxu0 0.0
    %155 = vmatpush1.msra.mxu0 %v139
    %156 = vmatprep.subr.mxu0 0.0
    %157 = vmatpush1.msra.mxu0 %v140
    %158 = vmatprep.subr.mxu0 0.0
    %159 = vmatpush1.msra.mxu0 %v141
    %160 = vmatprep.subr.mxu0 0.0
    %161 = vmatpush1.msra.mxu0 0.0
    %162 = vmatprep.subr.mxu0 0.0
    %163 = vmatpush1.msra.mxu0 0.0
    %164 = vmatprep.subr.mxu0 0.0
    %165 = vmatpush1.msra.mxu0 0.0
    %166 = vmatprep.subr.mxu0 0.0
    %167 = vmatpush1.msra.mxu0 0.0
    %168 = vmatprep.subr.mxu0 0.0
    %169 = vmatpush1.msra.mxu0 0.0
    %170 = vmatprep.subr.mxu0 0.0
    %171 = vmatpush1.msra.mxu0 0.0
    %172 = vmatprep.subr.mxu0 0.0
    %173 = vmatpush1.msra.mxu0 0.0
    %174 = vmatprep.subr.mxu0 0.0
    %175 = vmatpush1.msra.mxu0 0.0
    %176 = vmatprep.subr.mxu0 0.0
    %177 = vmatpush1.msra.mxu0 0.0
    %178 = vmatprep.subr.mxu0 0.0
    %179 = vmatpush1.msra.mxu0 0.0
    %180 = vmatprep.subr.mxu0 0.0
    %181 = vmatpush1.msra.mxu0 0.0
    %182 = vmatprep.subr.mxu0 0.0
    %183 = vmatpush1.msra.mxu0 0.0
    %184 = vmatprep.subr.mxu0 0.0
    %185 = vmatpush1.msra.mxu0 0.0
    %186 = vmatprep.subr.mxu0 0.0
    %187 = vmatpush1.msra.mxu0 0.0
    %188 = vmatprep.subr.mxu0 0.0
    %189 = vmatpush1.msra.mxu0 0.0
    %190 = vmatprep.subr.mxu0 0.0
    %191 = vmatpush1.msra.mxu0 0.0
    %192 = vmatprep.subr.mxu0 0.0
    %193 = vmatpush1.msra.mxu0 0.0
    %194 = vmatprep.subr.mxu0 0.0
    %195 = vmatpush1.msra.mxu0 0.0
    %196 = vmatprep.subr.mxu0 0.0
    %197 = vmatpush1.msra.mxu0 0.0
    %198 = vmatprep.subr.mxu0 0.0
    %199 = vmatpush1.msra.mxu0 0.0
    %200 = vmatprep.subr.mxu0 0.0
    %201 = vmatpush1.msra.mxu0 0.0
    %202 = vmatprep.subr.mxu0 0.0
    %203 = vmatpush1.msra.mxu0 0.0
    %204 = vmatprep.subr.mxu0 0.0
    %205 = vmatpush1.msra.mxu0 0.0
    %206 = vmatprep.subr.mxu0 0.0
    %207 = vmatpush1.msra.mxu0 0.0
    %208 = vmatprep.subr.mxu0 0.0
    %209 = vmatpush1.msra.mxu0 0.0
    %210 = vmatprep.subr.mxu0 0.0
    %211 = vmatpush1.msra.mxu0 0.0
    %212 = vmatprep.subr.mxu0 0.0
    %213 = vmatpush1.msra.mxu0 0.0
    %214 = vmatprep.subr.mxu0 0.0
    %215 = vmatpush1.msra.mxu0 0.0
    %216 = vmatprep.mubr.f32.mxu0 0.0
    %217 = vmatmul.mubr.f32.gmra.mrb[0].mxu0 %v150
    %v218 = vpop.f32.mrb[0].mxu0
    %v219 = vadd.f32 %v147, %v218
    %v220 = vpop.f32.mrb[0].mxu0
    %221 = vdwg.mxu0
    %v222 = vtanh.pop %v219
    %v223 = vmul.f32 %v222, 0.51
    %224 = vst [vmem:[#allocation7] sm:$0x3] %v223
    // Predicated region
    $region30: #{translation_forward.1} parent=1 // pred_check
      _
    $region31: #{translation_forward.1} parent=1 // pred_check_branch
      %226 = sbr.rel (0) target = $region33
    $region32: #{translation_forward.1} parent=1 // pred_region
      %s228 = ssub.s32 32, 32
      %229 = vsyncadd [#allocation4], %s228
      %s231 = sshll.u32 [#allocation7], 4
      %s232 = int_to_ptr.vmem [resolvable:$true] %s231
      %234 = dma.vmem_to_hbm [thread:$0]  %s232, 32, %s5, [#allocation4]
    $region33: #{translation_forward.1} parent=1 // pred_fallthru
      _
    // Predicated region
    $region34: #{translation_forward.1} parent=1 // pred_check
      _
    $region35: #{translation_forward.1} parent=1 // pred_check_branch
      %236 = sbr.rel (0) target = $region37
    $region36: #{translation_forward.1} parent=1 // pred_region
      %237 = dma.done [#allocation4], 32
    $region37: #{translation_forward.1} parent=1 // pred_fallthru
      _
    %238 = vsyncpa [#allocation3], 1
    %239 = vsyncpa [#allocation6], 1
    %240 = vsyncpa [#allocation4], 1

</llo_original>
